<compile_context>
chip_gen: v5e
topology: v5e:2x2
jax: 0.10.0
libtpu: 0.0.40
codegen_flags: <defaults>
</compile_context>

<pallas_src>
import functools

import jax
import jax.numpy as jnp
from jax.experimental import pallas as pl
from jax.experimental.pallas import tpu as pltpu


def _round_up(x, m):
    return ((x + m - 1) // m) * m


def _ls_ce_kernel(preds_ref, target_ref, out_ref, acc_ref, *,
                  epsilon, reduction, n_rows, n_cls, tile_n, tiles_per_split):
    """Process one (TILE_N, C) row tile: accumulate smoothing + NLL sums."""
    c = pl.program_id(0)              # core-split axis ("parallel")
    i = pl.program_id(1)              # row-tile axis   ("arbitrary")

    @pl.when(i == 0)
    def _init():
        acc_ref[0] = jnp.float32(0.0)   # running sum of -sum_c log_softmax
        acc_ref[1] = jnp.float32(0.0)   # running sum of per-row NLL

    x = preds_ref[...].astype(jnp.float32)          # (TILE_N, C), f32 compute
    tn = x.shape[0]

    # Global row indices of this tile -> mask padded rows of the last tile.
    tile_idx = c * tiles_per_split + i
    rows = tile_idx * tile_n + jax.lax.broadcasted_iota(jnp.int32, (tn, 1), 0)
    valid = rows < n_rows                           # (TILE_N, 1) bool

    # Stable logsumexp; log_softmax itself is never materialized:
    #   -sum_c log_softmax(x)_c = C * lse - sum_c x
    #   nll_row                 = lse - x[row, target[row]]
    m = jnp.max(x, axis=-1, keepdims=True)
    lse = m + jnp.log(jnp.sum(jnp.exp(x - m), axis=-1, keepdims=True))
    sum_x = jnp.sum(x, axis=-1, keepdims=True)

    # Gather x[row, target[row]] via VPU one-hot compare + lane reduction.
    # NOTE: out-of-range targets contribute 0 to the NLL term (no ignore_index
    # semantics, unlike torch F.nll_loss which would error).
    tgt = target_ref[...]                           # (TILE_N, 1) int32
    col = jax.lax.broadcasted_iota(jnp.int32, x.shape, 1)
    x_t = jnp.sum(jnp.where(col == tgt, x, 0.0), axis=-1, keepdims=True)

    smooth = jnp.where(valid, n_cls * lse - sum_x, 0.0)   # (TILE_N, 1)
    nll = jnp.where(valid, lse - x_t, 0.0)                # (TILE_N, 1)

    acc_ref[0] += jnp.sum(smooth)
    acc_ref[1] += jnp.sum(nll)

    @pl.when(i == pl.num_programs(1) - 1)
    def _finalize():
        inv_denom = (1.0 / n_rows) if reduction == "mean" else 1.0
        part = (acc_ref[0] * (inv_denom * epsilon / n_cls)
                + acc_ref[1] * ((1.0 - epsilon) * inv_denom))
        out_ref[...] = jnp.full(out_ref.shape, part, dtype=jnp.float32)


def label_smoothing_cross_entropy_loss(preds, target, epsilon=0.1,
                                       reduction="mean", tile_n=None):
    """Pallas equivalent of LabelSmoothingCrossEntropyLoss.forward."""
    # TODO(synk): reduction='none' (per-sample vector output) not implemented;
    #             only the scalar 'mean'/'sum' reductions run in-kernel.
    assert reduction in ("mean", "sum")
    n, n_cls = preds.shape
    target2d = target.astype(jnp.int32).reshape(n, 1)

    itemsize = jnp.dtype(preds.dtype).itemsize
    row_align = 16 if itemsize < 4 else 8           # packed-dtype sublane tile
    if tile_n is None:
        # ~4 MiB per preds tile -> double-buffered inputs + scratch stay well
        # under the scoped-VMEM budget on every generation (incl. v7x 64 MiB).
        budget = 4 * 1024 * 1024
        tile_n = max(row_align, min(1024, budget // max(1, n_cls * itemsize)))
        tile_n -= tile_n % row_align
        tile_n = max(row_align, min(tile_n, _round_up(n, row_align)))
    assert tile_n % row_align == 0, tile_n

    num_tiles = pl.cdiv(n, tile_n)
    # Split the row tiles across 2 TensorCores (v7x megacore) when they divide
    # evenly; on 1-TC chips the "parallel" axis just runs sequentially.
    splits = 2 if (num_tiles >= 2 and num_tiles % 2 == 0) else 1
    tiles_per_split = num_tiles // splits

    kernel = functools.partial(
        _ls_ce_kernel, epsilon=float(epsilon), reduction=reduction,
        n_rows=n, n_cls=n_cls, tile_n=tile_n, tiles_per_split=tiles_per_split)

    row_block = lambda c, i: (c * tiles_per_split + i, 0)

    partials = pl.pallas_call(
        kernel,
        out_shape=jax.ShapeDtypeStruct((splits, 8, 128), jnp.float32),
        grid_spec=pltpu.PrefetchScalarGridSpec(
            num_scalar_prefetch=0,
            grid=(splits, tiles_per_split),
            in_specs=[
                pl.BlockSpec((tile_n, n_cls), row_block),   # preds tile
                pl.BlockSpec((tile_n, 1), row_block),       # target column
            ],
            out_specs=pl.BlockSpec((1, 8, 128), lambda c, i: (c, 0, 0)),
            scratch_shapes=[pltpu.SMEM((2,), jnp.float32)],
        ),
        compiler_params=pltpu.CompilerParams(
            dimension_semantics=("parallel", "arbitrary"),
            vmem_limit_bytes=32 * 1024 * 1024,
        ),
    )(preds, target2d)

    # TODO(synk): very large class counts (LM-head vocab) would additionally
    #             need a class-tiled online-logsumexp (second grid axis on C).
    return jnp.sum(partials[:, 0, 0])


def _reference(preds, target, epsilon=0.1, reduction="mean"):
    # Pure-JAX reference mirroring the PyTorch module.
    n_cls = preds.shape[-1]
    log_preds = jax.nn.log_softmax(preds.astype(jnp.float32), axis=-1)
    smooth = -jnp.sum(log_preds, axis=-1)
    nll = -jnp.take_along_axis(log_preds, target[:, None], axis=-1)[:, 0]
    red = jnp.mean if reduction == "mean" else jnp.sum
    return red(smooth) / n_cls * epsilon + (1.0 - epsilon) * red(nll)


if __name__ == "__main__":
    key = jax.random.PRNGKey(0)
    k1, k2, k3, k4, k5, k6 = jax.random.split(key, 6)

    # Case 1: f32, rows divisible by tile -> 2-way split, 2 tiles per split.
    N1, C1 = 64, 256
    preds1 = jax.random.normal(k1, (N1, C1), dtype=jnp.float32)
    tgt1 = jax.random.randint(k2, (N1,), 0, C1, dtype=jnp.int32)
    out1 = label_smoothing_cross_entropy_loss(preds1, tgt1, epsilon=0.1,
                                              reduction="mean", tile_n=16)
    out1 = jax.block_until_ready(out1)
    ref1 = _reference(preds1, tgt1, 0.1, "mean")
    assert jnp.allclose(out1, ref1, rtol=1e-4, atol=1e-4), (out1, ref1)

    # Case 2: non-divisible rows (padded-row masking) + 'sum' reduction.
    N2, C2 = 60, 384
    preds2 = jax.random.normal(k3, (N2, C2), dtype=jnp.float32)
    tgt2 = jax.random.randint(k4, (N2,), 0, C2, dtype=jnp.int32)
    out2 = label_smoothing_cross_entropy_loss(preds2, tgt2, epsilon=0.1,
                                              reduction="sum", tile_n=16)
    out2 = jax.block_until_ready(out2)
    ref2 = _reference(preds2, tgt2, 0.1, "sum")
    assert jnp.allclose(out2, ref2, rtol=1e-4, atol=1e-4), (out2, ref2)

    # Case 3: bf16 activations streamed directly (f32 math inside the kernel).
    N3, C3 = 64, 256
    preds3 = jax.random.normal(k5, (N3, C3), dtype=jnp.bfloat16)
    tgt3 = jax.random.randint(k6, (N3,), 0, C3, dtype=jnp.int32)
    out3 = label_smoothing_cross_entropy_loss(preds3, tgt3, epsilon=0.1,
                                              reduction="mean", tile_n=32)
    out3 = jax.block_until_ready(out3)
    ref3 = _reference(preds3, tgt3, 0.1, "mean")
    assert jnp.allclose(out3, ref3, rtol=1e-3, atol=1e-3), (out3, ref3)

    print("KERNEL_OK")
</pallas_src>

<mosaic_0001>
module attributes {stable_mosaic.version = 11 : i64} {
  func.func @_ls_ce_kernel(%arg0: i32, %arg1: i32, %arg2: memref<16x256xf32, #tpu.memory_space<vmem>>, %arg3: memref<16x1xi32, #tpu.memory_space<vmem>>, %arg4: memref<1x8x128xf32, #tpu.memory_space<vmem>>, %arg5: memref<2xf32, #tpu.memory_space<smem>>) attributes {dimension_semantics = [#tpu.dimension_semantics<parallel>, #tpu.dimension_semantics<arbitrary>], iteration_bounds = array<i64: 2, 2>, scalar_prefetch = 0 : i64, scratch_operands = 1 : i64, tpu.core_type = #tpu.core_type<tc>, window_params = [{transform_indices = @transform_0, window_bounds = array<i64: 16, 256>}, {transform_indices = @transform_1, window_bounds = array<i64: 16, 1>}, {transform_indices = @transform_2, window_bounds = array<i64: 1, 8, 128>}]} {
    %c0_i32 = arith.constant 0 : i32
    %0 = arith.cmpi eq, %arg1, %c0_i32 : i32
    %1 = arith.extui %0 : i1 to i32
    %c0_i32_0 = arith.constant 0 : i32
    %2 = arith.cmpi ne, %1, %c0_i32_0 : i32
    scf.if %2 {
      %cst_17 = arith.constant 0.000000e+00 : f32
      %c0_18 = arith.constant 0 : index
      %56 = memref.load %arg5[%c0_18] : memref<2xf32, #tpu.memory_space<smem>>
      memref.store %cst_17, %arg5[%c0_18] : memref<2xf32, #tpu.memory_space<smem>>
      %cst_19 = arith.constant 0.000000e+00 : f32
      %c1_20 = arith.constant 1 : index
      %57 = memref.load %arg5[%c1_20] : memref<2xf32, #tpu.memory_space<smem>>
      memref.store %cst_19, %arg5[%c1_20] : memref<2xf32, #tpu.memory_space<smem>>
    } else {
    }
    %c0 = arith.constant 0 : index
    %c0_1 = arith.constant 0 : index
    %3 = vector.load %arg2[%c0, %c0_1] : memref<16x256xf32, #tpu.memory_space<vmem>>, vector<16x256xf32>
    %c2_i32 = arith.constant 2 : i32
    %4 = arith.muli %arg0, %c2_i32 : i32
    %5 = arith.addi %4, %arg1 : i32
    %c16_i32 = arith.constant 16 : i32
    %6 = arith.muli %5, %c16_i32 : i32
    %7 = tpu.iota {dimensions = array<i32: 0>} : vector<16x1xi32>
    %8 = vector.broadcast %6 : i32 to vector<16x1xi32>
    %9 = arith.addi %8, %7 : vector<16x1xi32>
    %c64_i32 = arith.constant 64 : i32
    %10 = vector.broadcast %c64_i32 : i32 to vector<16x1xi32>
    %11 = arith.cmpi slt, %9, %10 : vector<16x1xi32>
    %cst = arith.constant dense<0xFF800000> : vector<16xf32>
    %12 = vector.multi_reduction <maximumf>, %3, %cst [1] : vector<16x256xf32> to vector<16xf32>
    %13 = vector.shape_cast %12 : vector<16xf32> to vector<16x1xf32>
    %14 = vector.broadcast %13 : vector<16x1xf32> to vector<16x256xf32>
    %15 = arith.subf %3, %14 : vector<16x256xf32>
    %16 = math.exp %15 : vector<16x256xf32>
    %cst_2 = arith.constant dense<0.000000e+00> : vector<16xf32>
    %17 = vector.multi_reduction <add>, %16, %cst_2 [1] : vector<16x256xf32> to vector<16xf32>
    %18 = vector.shape_cast %17 : vector<16xf32> to vector<16x1xf32>
    %19 = math.log %18 : vector<16x1xf32>
    %20 = arith.addf %13, %19 : vector<16x1xf32>
    %cst_3 = arith.constant dense<0.000000e+00> : vector<16xf32>
    %21 = vector.multi_reduction <add>, %3, %cst_3 [1] : vector<16x256xf32> to vector<16xf32>
    %22 = vector.shape_cast %21 : vector<16xf32> to vector<16x1xf32>
    %c0_4 = arith.constant 0 : index
    %c0_5 = arith.constant 0 : index
    %23 = vector.load %arg3[%c0_4, %c0_5] : memref<16x1xi32, #tpu.memory_space<vmem>>, vector<16x1xi32>
    %24 = tpu.iota {dimensions = array<i32: 1>} : vector<16x256xi32>
    %25 = vector.broadcast %23 : vector<16x1xi32> to vector<16x256xi32>
    %26 = arith.cmpi eq, %24, %25 : vector<16x256xi32>
    %cst_6 = arith.constant 0.000000e+00 : f32
    %27 = vector.broadcast %cst_6 : f32 to vector<16x256xf32>
    %28 = arith.select %26, %3, %27 : vector<16x256xi1>, vector<16x256xf32>
    %cst_7 = arith.constant dense<0.000000e+00> : vector<16xf32>
    %29 = vector.multi_reduction <add>, %28, %cst_7 [1] : vector<16x256xf32> to vector<16xf32>
    %30 = vector.shape_cast %29 : vector<16xf32> to vector<16x1xf32>
    %cst_8 = arith.constant 2.560000e+02 : f32
    %31 = vector.broadcast %cst_8 : f32 to vector<16x1xf32>
    %32 = arith.mulf %31, %20 : vector<16x1xf32>
    %33 = arith.subf %32, %22 : vector<16x1xf32>
    %cst_9 = arith.constant 0.000000e+00 : f32
    %34 = vector.broadcast %cst_9 : f32 to vector<16x1xf32>
    %35 = arith.select %11, %33, %34 : vector<16x1xi1>, vector<16x1xf32>
    %36 = arith.subf %20, %30 : vector<16x1xf32>
    %cst_10 = arith.constant 0.000000e+00 : f32
    %37 = vector.broadcast %cst_10 : f32 to vector<16x1xf32>
    %38 = arith.select %11, %36, %37 : vector<16x1xi1>, vector<16x1xf32>
    %c0_11 = arith.constant 0 : index
    %39 = memref.load %arg5[%c0_11] : memref<2xf32, #tpu.memory_space<smem>>
    %40 = vector.shape_cast %35 : vector<16x1xf32> to vector<1x16x1xf32>
    %cst_12 = arith.constant dense<0.000000e+00> : vector<1xf32>
    %41 = vector.multi_reduction <add>, %40, %cst_12 [1, 2] : vector<1x16x1xf32> to vector<1xf32>
    %42 = vector.shape_cast %41 : vector<1xf32> to vector<1x1x1xf32>
    %43 = vector.extract %42[0, 0, 0] : f32 from vector<1x1x1xf32>
    %44 = arith.addf %39, %43 : f32
    %c0_13 = arith.constant 0 : index
    %45 = memref.load %arg5[%c0_13] : memref<2xf32, #tpu.memory_space<smem>>
    memref.store %44, %arg5[%c0_13] : memref<2xf32, #tpu.memory_space<smem>>
    %c1 = arith.constant 1 : index
    %46 = memref.load %arg5[%c1] : memref<2xf32, #tpu.memory_space<smem>>
    %47 = vector.shape_cast %38 : vector<16x1xf32> to vector<1x16x1xf32>
    %cst_14 = arith.constant dense<0.000000e+00> : vector<1xf32>
    %48 = vector.multi_reduction <add>, %47, %cst_14 [1, 2] : vector<1x16x1xf32> to vector<1xf32>
    %49 = vector.shape_cast %48 : vector<1xf32> to vector<1x1x1xf32>
    %50 = vector.extract %49[0, 0, 0] : f32 from vector<1x1x1xf32>
    %51 = arith.addf %46, %50 : f32
    %c1_15 = arith.constant 1 : index
    %52 = memref.load %arg5[%c1_15] : memref<2xf32, #tpu.memory_space<smem>>
    memref.store %51, %arg5[%c1_15] : memref<2xf32, #tpu.memory_space<smem>>
    %c1_i32 = arith.constant 1 : i32
    %53 = arith.cmpi eq, %arg1, %c1_i32 : i32
    %54 = arith.extui %53 : i1 to i32
    %c0_i32_16 = arith.constant 0 : i32
    %55 = arith.cmpi ne, %54, %c0_i32_16 : i32
    scf.if %55 {
      %c0_17 = arith.constant 0 : index
      %56 = memref.load %arg5[%c0_17] : memref<2xf32, #tpu.memory_space<smem>>
      %cst_18 = arith.constant 6.10351572E-6 : f32
      %57 = arith.mulf %56, %cst_18 : f32
      %c1_19 = arith.constant 1 : index
      %58 = memref.load %arg5[%c1_19] : memref<2xf32, #tpu.memory_space<smem>>
      %cst_20 = arith.constant 1.406250e-02 : f32
      %59 = arith.mulf %58, %cst_20 : f32
      %60 = arith.addf %57, %59 : f32
      %61 = vector.broadcast %60 : f32 to vector<1x8x128xf32>
      %c0_21 = arith.constant 0 : index
      %c0_22 = arith.constant 0 : index
      %c0_23 = arith.constant 0 : index
      %62 = vector.load %arg4[%c0_21, %c0_22, %c0_23] : memref<1x8x128xf32, #tpu.memory_space<vmem>>, vector<1x8x128xf32>
      tpu.vector_store %arg4[%c0_21, %c0_22, %c0_23], %61 {strides = array<i32>} : memref<1x8x128xf32, #tpu.memory_space<vmem>>, vector<1x8x128xf32>,
    } else {
    }
    return
  }
  func.func @transform_0(%arg0: i32, %arg1: i32) -> (i32, i32) {
    %c2_i32 = arith.constant 2 : i32
    %0 = arith.muli %arg0, %c2_i32 : i32
    %1 = arith.addi %0, %arg1 : i32
    %c0_i32 = arith.constant 0 : i32
    %c0_i32_0 = arith.constant 0 : i32
    return %1, %c0_i32 : i32, i32
  }
  func.func @transform_1(%arg0: i32, %arg1: i32) -> (i32, i32) {
    %c2_i32 = arith.constant 2 : i32
    %0 = arith.muli %arg0, %c2_i32 : i32
    %1 = arith.addi %0, %arg1 : i32
    %c0_i32 = arith.constant 0 : i32
    %c0_i32_0 = arith.constant 0 : i32
    return %1, %c0_i32 : i32, i32
  }
  func.func @transform_2(%arg0: i32, %arg1: i32) -> (i32, i32, i32) {
    %c0_i32 = arith.constant 0 : i32
    %c0_i32_0 = arith.constant 0 : i32
    %c0_i32_1 = arith.constant 0 : i32
    return %arg0, %c0_i32, %c0_i32_0 : i32, i32, i32
  }
}

</mosaic_0001>

<llo_original>
// kernel: tpu_custom_call.1
$region0: #{tpu_custom_call.1}
  #allocation0 [shape = 'u32[]', space=smem, size = 0x4, offset = 0x4, fixed_abs, tag = 'smem constant byte address 0x4 - core index']
  #allocation1 [shape = 'u32[72,128]{1,0:T(1,128)}', space=vmem, size = 0x9000, scoped, tag = 'internal scratch']
  #allocation2 [shape = 'f32[2]{0:T(128)}', space=smem, size = 0x200, scoped, tag = 'scratch operand']
  %s0 = inlined_call_operand.hbm [shape: f32[64,256], index: 0, kind: input, shape index: {}]
  %s1 = inlined_call_operand.vmem [shape: s32[64,1], index: 1, kind: input, shape index: {}]
  %s2 = inlined_call_operand.hbm [shape: f32[2,8,128], index: 2, kind: output, shape index: {}]
  %s3 = sld [smem:[#allocation0]]
  $region53: #{tpu_custom_call.1} parent=0
    _
  %s5 = ssub.s32 1, %s3
  %s6 = scalar_select 0, %s5, %s3
  $region1: #{tpu_custom_call.1} parent=0
    #allocation3 [shape = 'u8[32768]{0}', space=vmem, size = 0x8000, scoped, tag = 'input window, operand 0']
    #allocation4 [shape = 's32[2]{0}', space=sflag, size = 0x8, scoped, tag = 'scoped memory for tpu_custom_call.1']
    #allocation5 [shape = 's32[2]{0}', space=sflag, size = 0x8, scoped, tag = 'scoped memory for tpu_custom_call.1']
    #allocation6 [shape = 'u8[8192]{0}', space=vmem, size = 0x2000, scoped, tag = 'output window, operand 0']
    %7 = vsyncpa [#allocation4], 0
    %s8 = scalar_lea.sflag [#allocation4], 1
    %9 = vsyncpa %s8, 0
    %10 = vsyncpa [#allocation5], 0
    %s11 = scalar_lea.sflag [#allocation5], 1
    %12 = vsyncpa %s11, 0
    loop: start=0, step=1, limit=6
    $region2: #{tpu_custom_call.1} parent=1 // loop_pre_header
      _
    $region3: #{tpu_custom_call.1} parent=1 // loop_header
      %s14 = sphi 0, %s18
      %p15 = scmp.ge.s32.totalorder %s14, 6
      %s21 = sphi 0, %s33
      %s22 = sphi 0, %s29
      %s23 = sphi 0, %s21
      %s24 = sphi 0, %s22
      %s25 = sphi 0, %s23
      %s26 = sphi 0, %s24
      %s40 = sphi 0, %s42
      %s43 = sphi 0, %s40
      %s44 = sphi 0, %s43
      %s60 = sphi 0, %s44
      %s70 = sphi 0, %s72
      %s73 = sphi 0, %s70
      %s74 = sphi 0, %s73
      %s90 = sphi 0, %s74
      %s96 = sphi 0, %s98
      %s99 = sphi 0, %s96
      %s100 = sphi 0, %s99
      %s116 = sphi 0, %s100
    $region4: #{tpu_custom_call.1} parent=1 // loop_header_branch
      %17 = sbr.rel (%p15) target = $region8
    $region5: #{tpu_custom_call.1} parent=1 // loop_body
      %s19 = ssub.s32 %s14, 1
      %s20 = ssub.s32 %s14, 2
      %s27 = sadd.s32 1, %s22
      %p28 = scmp.ge.s32.totalorder %s27, 2
      %s29 = scalar_select %p28, 0, %s27
      %s30 = sadd.s32 1, %s21
      %s31 = scalar_select %p28, %s30, %s21
      %p32 = scmp.ge.s32.totalorder %s31, 2
      %s33 = scalar_select %p32, 0, %s31
      %s34 = smul.u32 %s21, 2
      %s35 = sadd.s32 %s34, %s22
      %s36 = smul.u32 %s33, 2
      %s37 = sadd.s32 %s36, %s29
      %s38 = ssub.s32 %s35, %s37
      %p39 = scmp.eq.s32.totalorder %s38, 0
      %s41 = sadd.s32 %s40, 1
      %s42 = scalar_select %p39, %s40, %s41
      %p45 = pneg %p39
      %p46 = scmp.eq.s32.totalorder %s14, 3
      %p47 = por %p45, %p46
      %p48 = scmp.ne.s32.totalorder %s40, %s43
      %p49 = scmp.eq.s32.totalorder %s14, 0
      %p50 = por %p48, %p49
      %p51 = scmp.ne.s32.totalorder %s40, %s43
      %p52 = scmp.eq.s32.totalorder %s19, 3
      %p53 = por %p51, %p52
      %p54 = scmp.ne.s32.totalorder %s43, %s44
      %p55 = scmp.eq.s32.totalorder %s19, 0
      %p56 = por %p54, %p55
      %p57 = scmp.ne.s32.totalorder %s43, %s44
      %p58 = scmp.eq.s32.totalorder %s20, 3
      %p59 = por %p57, %p58
      %p61 = scmp.ne.s32.totalorder %s44, %s60
      %p62 = scmp.eq.s32.totalorder %s20, 0
      %p63 = por %p61, %p62
      %s64 = smul.u32 %s21, 2
      %s65 = sadd.s32 %s64, %s22
      %s66 = smul.u32 %s33, 2
      %s67 = sadd.s32 %s66, %s29
      %s68 = ssub.s32 %s65, %s67
      %p69 = scmp.eq.s32.totalorder %s68, 0
      %s71 = sadd.s32 %s70, 1
      %s72 = scalar_select %p69, %s70, %s71
      %p75 = pneg %p69
      %p76 = scmp.eq.s32.totalorder %s14, 3
      %p77 = por %p75, %p76
      %p78 = scmp.ne.s32.totalorder %s70, %s73
      %p79 = scmp.eq.s32.totalorder %s14, 0
      %p80 = por %p78, %p79
      %p81 = scmp.ne.s32.totalorder %s70, %s73
      %p82 = scmp.eq.s32.totalorder %s19, 3
      %p83 = por %p81, %p82
      %p84 = scmp.ne.s32.totalorder %s73, %s74
      %p85 = scmp.eq.s32.totalorder %s19, 0
      %p86 = por %p84, %p85
      %p87 = scmp.ne.s32.totalorder %s73, %s74
      %p88 = scmp.eq.s32.totalorder %s20, 3
      %p89 = por %p87, %p88
      %p91 = scmp.ne.s32.totalorder %s74, %s90
      %p92 = scmp.eq.s32.totalorder %s20, 0
      %p93 = por %p91, %p92
      %s94 = ssub.s32 %s21, %s33
      %p95 = scmp.eq.s32.totalorder %s94, 0
      %s97 = sadd.s32 %s96, 1
      %s98 = scalar_select %p95, %s96, %s97
      %p101 = pneg %p95
      %p102 = scmp.eq.s32.totalorder %s14, 3
      %p103 = por %p101, %p102
      %p104 = scmp.ne.s32.totalorder %s96, %s99
      %p105 = scmp.eq.s32.totalorder %s14, 0
      %p106 = por %p104, %p105
      %p107 = scmp.ne.s32.totalorder %s96, %s99
      %p108 = scmp.eq.s32.totalorder %s19, 3
      %p109 = por %p107, %p108
      %p110 = scmp.ne.s32.totalorder %s99, %s100
      %p111 = scmp.eq.s32.totalorder %s19, 0
      %p112 = por %p110, %p111
      %p113 = scmp.ne.s32.totalorder %s99, %s100
      %p114 = scmp.eq.s32.totalorder %s20, 3
      %p115 = por %p113, %p114
      %p117 = scmp.ne.s32.totalorder %s100, %s116
      %p118 = scmp.eq.s32.totalorder %s20, 0
      %p119 = por %p117, %p118
      %p120 = scmp.le.s32.totalorder 1, %s14
      %p121 = scmp.lt.s32.totalorder %s14, 5
      %p122 = pnand %p120, %p121
      %p123 = pneg %p122
      // Predicated region
      $region9: #{tpu_custom_call.1} parent=5 // pred_check
        _
      $region10: #{tpu_custom_call.1} parent=5 // pred_check_branch
        %125 = sbr.rel (%p122) target = $region12
      $region11: #{tpu_custom_call.1} parent=5 // pred_region
        %s126 = ssub.s32 %s14, 1
      $region12: #{tpu_custom_call.1} parent=5 // pred_fallthru
        _
      %p127 = scmp.lt.s32.totalorder %s14, 4
      // Predicated region
      $region13: #{tpu_custom_call.1} parent=5 // pred_check
        %p128 = pneg %p127
      $region14: #{tpu_custom_call.1} parent=5 // pred_check_branch
        %130 = sbr.rel (%p128) target = $region16
      $region15: #{tpu_custom_call.1} parent=5 // pred_region
        // Predicated region
        $region17: #{tpu_custom_call.1} parent=15 // pred_check
          %p131 = pneg %p50
        $region18: #{tpu_custom_call.1} parent=15 // pred_check_branch
          %133 = sbr.rel (%p131) target = $region20
        $region19: #{tpu_custom_call.1} parent=15 // pred_region
          %s134 = sand.u32 %s40, 1
          %s135 = scalar_lea.sflag [#allocation4], %s134
          %s136 = sand.u32 %s40, 1
          %s137 = smul.addr %s136, 32
          %s138 = scalar_lea.vmem [#allocation3], %s137
          %s139 = smul.u32 %s21, 2
          %s140 = sadd.s32 %s139, %s22
          %s141 = smul.u32 2, %s140
          %143 = vsyncadd %s135, 0
          %s144 = smul.addr %s141, 2
          %s145 = smul.addr %s144, 8
          %s146 = scalar_lea.hbm %s0, %s145
          %s147 = sshll.u32 %s146, 4
          %s148 = int_to_ptr.hbm [resolvable:$true] %s147
          %s149 = sshll.u32 %s138, 4
          %s150 = int_to_ptr.vmem [resolvable:$true] %s149
          %155 = dma.hbm_to_vmem [thread:$0]  %s148, 512, %s150, %s135, 256, 256, 16
        $region20: #{tpu_custom_call.1} parent=15 // pred_fallthru
          _
        // Predicated region
        $region21: #{tpu_custom_call.1} parent=15 // pred_check
          %p156 = pneg %p80
        $region22: #{tpu_custom_call.1} parent=15 // pred_check_branch
          %158 = sbr.rel (%p156) target = $region24
        $region23: #{tpu_custom_call.1} parent=15 // pred_region
          %s159 = smul.u32 %s21, 2
          %s160 = sadd.s32 %s159, %s22
          %s161 = smul.u32 2, %s160
          %p162 = scmp.lt.s32.totalorder %s161, 7
          %s163 = scalar_select %p162, %s161, 7
          %s164 = smul.addr %s163, 8
          %s165 = scalar_lea.vmem %s1, %s164
          %s166 = smul.u32 %s21, 2
          %s167 = sadd.s32 %s166, %s22
          %s168 = smul.u32 2, %s167
        $region24: #{tpu_custom_call.1} parent=15 // pred_fallthru
          _
      $region16: #{tpu_custom_call.1} parent=5 // pred_fallthru
        _
      %p169 = scmp.le.s32.totalorder 1, %s14
      %p170 = scmp.lt.s32.totalorder %s14, 5
      %p171 = pnand %p169, %p170
      %p172 = pneg %p171
      // Predicated region
      $region25: #{tpu_custom_call.1} parent=5 // pred_check
        _
      $region26: #{tpu_custom_call.1} parent=5 // pred_check_branch
        %174 = sbr.rel (%p171) target = $region28
      $region27: #{tpu_custom_call.1} parent=5 // pred_region
        %s175 = ssub.s32 %s14, 1
        %s176 = sand.u32 %s43, 1
        %s177 = scalar_lea.sflag [#allocation4], %s176
        %s178 = sand.u32 %s43, 1
        %s179 = smul.addr %s178, 32
        %s180 = scalar_lea.vmem [#allocation3], %s179
        // Predicated region
        $region29: #{tpu_custom_call.1} parent=27 // pred_check
          %p181 = pneg %p56
        $region30: #{tpu_custom_call.1} parent=27 // pred_check_branch
          %183 = sbr.rel (%p181) target = $region32
        $region31: #{tpu_custom_call.1} parent=27 // pred_region
          %185 = dma.done %s177, 512
        $region32: #{tpu_custom_call.1} parent=27 // pred_fallthru
          _
        %s186 = sand.u32 %s43, 1
        %s187 = scalar_lea.sflag [#allocation4], %s186
        %s188 = sand.u32 %s43, 1
        %s189 = smul.addr %s188, 32
        %s190 = scalar_lea.vmem [#allocation3], %s189
        %p191 = pneg %p56
        %p192 = pneg %p53
        %s193 = smul.u32 %s23, 2
        %s194 = sadd.s32 %s193, %s24
        %s195 = smul.u32 2, %s194
        %p196 = scmp.lt.s32.totalorder %s195, 7
        %s197 = scalar_select %p196, %s195, 7
        %s198 = smul.addr %s197, 8
        %s199 = scalar_lea.vmem %s1, %s198
        %p200 = pneg %p86
        %p201 = pneg %p83
        %p202 = pneg %p112
        %p203 = pneg %p109
        %s204 = sand.u32 %s99, 1
        %s205 = scalar_lea.sflag [#allocation5], %s204
        %s206 = sand.u32 %s99, 1
        %s207 = smul.addr %s206, 8
        %s208 = scalar_lea.vmem [#allocation6], %s207
        %s209 = smul.u32 %s23, 2
        %s210 = sadd.s32 %s209, %s24
        %s211 = smul.u32 2, %s210
        %s212 = smul.u32 %s23, 2
        %s213 = sadd.s32 %s212, %s24
        %s214 = smul.u32 2, %s213
        %p215 = scmp.lt.s32.totalorder %s214, 7
        %s216 = scalar_select %p215, %s214, 7
        %s217 = smul.addr %s216, 8
        %s218 = scalar_lea.vmem %s1, %s217
        %s219 = smul.u32 %s23, 2
        %s220 = sadd.s32 %s219, %s24
        %s221 = smul.u32 2, %s220
        %p222 = scmp.eq.s32.totalorder %s24, 0
        // Predicated region
        $region33: #{tpu_custom_call.1} parent=27 // pred_check
          %p223 = pneg %p222
        $region34: #{tpu_custom_call.1} parent=27 // pred_check_branch
          %225 = sbr.rel (%p223) target = $region36
        $region35: #{tpu_custom_call.1} parent=27 // pred_region
          %s226 = scalar_lea.smem [#allocation2], 0
          %227 = sst [smem:[%s226]] 0.0
          %s228 = scalar_lea.smem [#allocation2], 1
          %229 = sst [smem:[%s228]] 0.0
        $region36: #{tpu_custom_call.1} parent=27 // pred_fallthru
          _
        %v230 = vld [vmem:[%s180] sm:$0xff]
        %v231 = vld [vmem:[%s180 + $0x8] sm:$0xff]
        %v232 = vld [vmem:[%s180 + $0x10] sm:$0xff]
        %v233 = vld [vmem:[%s180 + $0x18] sm:$0xff]
        %s234 = smul.u32 %s23, 2
        %s235 = sadd.s32 %s234, %s24
        %s236 = smul.u32 %s235, 16
        %v237 = vlaneseq
        %v238 = vshrl.u32 %v237, 7
        %v239 = vadd.s32 %v238, 8
        %v240 = vstv %s236
        %v241 = vadd.s32 %v240, %v238
        %v242 = vadd.s32 %v240, %v239
        %vm243 = vcmp.lt.s32.totalorder %v241, 64
        %vm244 = vcmp.lt.s32.totalorder %v242, 64
        %v245 = vmax.f32 %v230, %v231
        %246 = vmax.xlane.f32.xlu0 %v245
        %v247 = vpop.xlane.xlu0 %246
        %v248 = vmax.f32 %v232, %v233
        %249 = vmax.xlane.f32.xlu0 %v248
        %v250 = vpop.xlane.xlu0 %249
        %v251 = vsub.f32 %v230, %v247
        %v252 = vsub.f32 %v231, %v247
        %v253 = vsub.f32 %v232, %v250
        %v254 = vsub.f32 %v233, %v250
        %v255 = vmul.f32 %v251, 1.442695
        %v256 = vpow.pop %v255
        %v257 = vmul.f32 %v252, 1.442695
        %v258 = vpow.pop %v257
        %v259 = vmul.f32 %v253, 1.442695
        %v260 = vpow.pop %v259
        %v261 = vmul.f32 %v254, 1.442695
        %v262 = vpow.pop %v261
        %v263 = vadd.f32 %v256, %v258
        %264 = vadd.xlane.f32.xlu0 %v263
        %v265 = vpop.xlane.xlu0 %264
        %v266 = vadd.f32 %v260, %v262
        %267 = vadd.xlane.f32.xlu0 %v266
        %v268 = vpop.xlane.xlu0 %267
        %v269 = vlog2.pop %v265
        %v270 = vmul.f32 %v269, 0.6931472
        %v271 = vlog2.pop %v268
        %v272 = vmul.f32 %v271, 0.6931472
        %v273 = vadd.f32 %v247, %v270
        %v274 = vadd.f32 %v250, %v272
        %v275 = vadd.f32 %v230, %v231
        %276 = vadd.xlane.f32.xlu0 %v275
        %v277 = vpop.xlane.xlu0 %276
        %v278 = vadd.f32 %v232, %v233
        %279 = vadd.xlane.f32.xlu0 %v278
        %v280 = vpop.xlane.xlu0 %279
        %v281 = vld [vmem:[%s218] sm:$0xff]
        %v282 = vld [vmem:[%s218 + $0x8] sm:$0xff]
        %v283 = vlaneseq
        %v284 = vand.u32 %v283, 127
        %v285 = vadd.s32 %v284, 128
        %286 = vset.pattern.permute.xlu0 0
        %287 = vperm.xlu0 %286, %v281
        %v288 = vpop.permute.xlu0 %287
        %289 = vset.pattern.permute.xlu0 0
        %290 = vperm.xlu0 %289, %v282
        %v291 = vpop.permute.xlu0 %290
        %vm292 = vcmp.eq.s32.totalorder %v284, %v288
        %vm293 = vcmp.eq.s32.totalorder %v285, %v288
        %vm294 = vcmp.eq.s32.totalorder %v284, %v291
        %vm295 = vcmp.eq.s32.totalorder %v285, %v291
        %v296 = vsel %vm292, %v230, 0.0
        %v297 = vsel %vm293, %v231, 0.0
        %v298 = vsel %vm294, %v232, 0.0
        %v299 = vsel %vm295, %v233, 0.0
        %v300 = vadd.f32 %v296, %v297
        %301 = vadd.xlane.f32.xlu0 %v300
        %v302 = vpop.xlane.xlu0 %301
        %v303 = vadd.f32 %v298, %v299
        %304 = vadd.xlane.f32.xlu0 %v303
        %v305 = vpop.xlane.xlu0 %304
        %v306 = vmul.f32 %v273, 256.0
        %v307 = vmul.f32 %v274, 256.0
        %v308 = vsub.f32 %v306, %v277
        %v309 = vsub.f32 %v307, %v280
        %v310 = vsel %vm243, %v308, 0.0
        %v311 = vsel %vm244, %v309, 0.0
        %v312 = vsub.f32 %v273, %v302
        %v313 = vsub.f32 %v274, %v305
        %v314 = vsel %vm243, %v312, 0.0
        %v315 = vsel %vm244, %v313, 0.0
        %s316 = sld [smem:[#allocation2]]
        %vm317 = vcmask 7168
        %v318 = vsel %vm317, %v310, 0.0
        %v319 = vsel %vm317, %v311, 0.0
        %v320 = vadd.f32 %v318, %v319
        %321 = vadd.xlane.f32.xlu0 %v320
        %v322 = vpop.xlane.xlu0 %321
        %v323 = vrot.slane %v322, 4
        %v324 = vadd.f32 %v322, %v323
        %v325 = vrot.slane %v324, 2
        %v326 = vadd.f32 %v324, %v325
        %v327 = vrot.slane %v326, 1
        %v328 = vadd.f32 %v326, %v327
        %s329 = vtos %v328
        %s330 = sadd.f32 %s316, %s329
        %s331 = scalar_lea.smem [#allocation2], 0
        %332 = sst [smem:[%s331]] %s330
        %s333 = sld [smem:[#allocation2 + $0x1]]
        %v334 = vsel %vm317, %v314, 0.0
        %v335 = vsel %vm317, %v315, 0.0
        %v336 = vadd.f32 %v334, %v335
        %337 = vadd.xlane.f32.xlu0 %v336
        %v338 = vpop.xlane.xlu0 %337
        %v339 = vrot.slane %v338, 4
        %v340 = vadd.f32 %v338, %v339
        %v341 = vrot.slane %v340, 2
        %v342 = vadd.f32 %v340, %v341
        %v343 = vrot.slane %v342, 1
        %v344 = vadd.f32 %v342, %v343
        %s345 = vtos %v344
        %s346 = sadd.f32 %s333, %s345
        %s347 = scalar_lea.smem [#allocation2], 1
        %348 = sst [smem:[%s347]] %s346
        %p349 = scmp.eq.s32.totalorder %s24, 1
        // Predicated region
        $region37: #{tpu_custom_call.1} parent=27 // pred_check
          %p350 = pneg %p349
        $region38: #{tpu_custom_call.1} parent=27 // pred_check_branch
          %352 = sbr.rel (%p350) target = $region40
        $region39: #{tpu_custom_call.1} parent=27 // pred_region
          %s353 = sld [smem:[#allocation2]]
          %s354 = smul.f32 %s353, 6.1035157e-06
          %s355 = sld [smem:[#allocation2 + $0x1]]
          %s356 = smul.f32 %s355, 0.0140625
          %s357 = sadd.f32 %s354, %s356
          %v358 = vstv %s357
          %359 = vst [vmem:[%s208] sm:$0xff] %v358
        $region40: #{tpu_custom_call.1} parent=27 // pred_fallthru
          _
        %s360 = sand.u32 %s99, 1
        %s361 = scalar_lea.sflag [#allocation5], %s360
        %s362 = sand.u32 %s99, 1
        %s363 = smul.addr %s362, 8
        %s364 = scalar_lea.vmem [#allocation6], %s363
        // Predicated region
        $region41: #{tpu_custom_call.1} parent=27 // pred_check
          %p365 = pneg %p109
        $region42: #{tpu_custom_call.1} parent=27 // pred_check_branch
          %367 = sbr.rel (%p365) target = $region44
        $region43: #{tpu_custom_call.1} parent=27 // pred_region
          %369 = vsyncadd %s361, 0
          %s370 = smul.addr %s23, 8
          %s371 = scalar_lea.hbm %s2, %s370
          %s373 = sshll.u32 %s364, 4
          %s374 = int_to_ptr.vmem [resolvable:$true] %s373
          %s375 = sshll.u32 %s371, 4
          %s376 = int_to_ptr.hbm [resolvable:$true] %s375
          %378 = dma.vmem_to_hbm [thread:$0]  %s374, 128, %s376, %s361
        $region44: #{tpu_custom_call.1} parent=27 // pred_fallthru
          _
      $region28: #{tpu_custom_call.1} parent=5 // pred_fallthru
        _
      %p379 = scmp.le.s32.totalorder 2, %s14
      // Predicated region
      $region45: #{tpu_custom_call.1} parent=5 // pred_check
        %p380 = pneg %p379
      $region46: #{tpu_custom_call.1} parent=5 // pred_check_branch
        %382 = sbr.rel (%p380) target = $region48
      $region47: #{tpu_custom_call.1} parent=5 // pred_region
        %s383 = ssub.s32 %s14, 2
        // Predicated region
        $region49: #{tpu_custom_call.1} parent=47 // pred_check
          %p384 = pneg %p115
        $region50: #{tpu_custom_call.1} parent=47 // pred_check_branch
          %386 = sbr.rel (%p384) target = $region52
        $region51: #{tpu_custom_call.1} parent=47 // pred_region
          %s387 = sand.u32 %s100, 1
          %s388 = scalar_lea.sflag [#allocation5], %s387
          %s389 = sand.u32 %s100, 1
          %s390 = smul.addr %s389, 8
          %s391 = scalar_lea.vmem [#allocation6], %s390
          %393 = dma.done %s388, 128
        $region52: #{tpu_custom_call.1} parent=47 // pred_fallthru
          _
      $region48: #{tpu_custom_call.1} parent=5 // pred_fallthru
        _
    $region6: #{tpu_custom_call.1} parent=1 // loop_footer
      %s18 = sadd.s32 1, %s14
    $region7: #{tpu_custom_call.1} parent=1 // loop_footer_branch
      %13 = sbr.rel target = $region3
    $region8: #{tpu_custom_call.1} parent=1 // loop_exit
      _
    %394 = vsyncpa [#allocation4], 1
    %s395 = scalar_lea.sflag [#allocation4], 1
    %396 = vsyncpa %s395, 1
    %397 = vsyncpa [#allocation5], 1
    %s398 = scalar_lea.sflag [#allocation5], 1
    %399 = vsyncpa %s398, 1

</llo_original>
